<compile_context>
chip_gen: v5e
topology: v5e:2x2
jax: 0.10.0
libtpu: 0.0.40
codegen_flags: <defaults>
</compile_context>

<pallas_src>
import jax
import jax.numpy as jnp
from jax.experimental import pallas as pl
from jax.experimental.pallas import tpu as pltpu


# ----------------------------------------------------------------------------- kernel

def _linear_kernel(x_ref, w_ref, b_ref, o_ref):
    # x_ref: [TN, H]   w_ref: [H, C]   b_ref: [1, C] (f32)   o_ref: [TN, C]
    acc = jnp.dot(x_ref[...], w_ref[...], preferred_element_type=jnp.float32)
    o_ref[...] = (acc + b_ref[...].astype(jnp.float32)).astype(o_ref.dtype)


# ----------------------------------------------------------------------------- tiling

def _vmem_capacity_bytes():
    """Physical VMEM per TensorCore; conservative (v7x) fallback if unavailable."""
    try:
        info = pltpu.get_tpu_info()
        cap = getattr(info, "vmem_capacity_bytes", None)
        if cap:
            return int(cap)
    except Exception:
        pass
    return 64 * 1024 * 1024


def _choose_tiling(n, h, c, x_itemsize, out_itemsize, resident_bytes):
    """Returns (tile_n, vmem_limit_bytes), chip-aware.

    resident_bytes: weight + bias bytes, x2 for Pallas' default double buffering
    (they have constant index maps but still get two VMEM buffers each).
    """
    cap = _vmem_capacity_bytes()
    v7x_like = cap <= 64 * 1024 * 1024
    if v7x_like:
        tile_budget = 16 * 1024 * 1024
        vmem_limit = 32 * 1024 * 1024
        max_tile = 2048
    else:  # v5e / v6e: 128 MiB physical VMEM
        tile_budget = 32 * 1024 * 1024
        vmem_limit = 64 * 1024 * 1024
        max_tile = 4096

    tile_budget = max(tile_budget - resident_bytes, 1 * 1024 * 1024)
    per_row = 2 * (h * x_itemsize + c * out_itemsize)  # double-buffered x + out tiles
    tn = min(tile_budget // max(per_row, 1), max_tile)
    tn = max((int(tn) // 8) * 8, 8)                    # sublane-aligned

    if n <= tn:
        if v7x_like and n >= 16:
            # >= 2 roughly balanced grid steps so both v7x TensorCores get work.
            tn = ((pl.cdiv(n, 2) + 7) // 8) * 8
        else:
            tn = n                                      # full-extent block (always legal)
    return tn, vmem_limit


# ----------------------------------------------------------------------------- params

def prepare_classifier_params(weight, bias, param_dtype=jnp.bfloat16):
    """ONE-TIME layout prep (call outside the forward loop).

    weight: [C, H] (PyTorch nn.Linear layout), bias: [C]
    returns (w_hc, b2d): weight transposed to [H, C] in `param_dtype`
    (bf16 by default -> half the resident-weight bytes, MXU-native), and the bias
    as [1, C] kept in f32 so the epilogue add stays full precision.
    """
    w_hc = jnp.asarray(weight).T.astype(param_dtype)          # [H, C]
    b2d = jnp.asarray(bias).astype(jnp.float32).reshape(1, -1)  # [1, C]
    return w_hc, b2d


def init_classifier_params(key, n_hidden, n_classes):
    """Deterministic init mirroring nn.Linear.reset_parameters():
    weight ~ U(-k, k), bias ~ U(-k, k) with k = 1/sqrt(n_hidden)."""
    k = 1.0 / jnp.sqrt(jnp.float32(n_hidden))
    kw, kb = jax.random.split(key)
    weight = jax.random.uniform(kw, (n_classes, n_hidden), jnp.float32, -k, k)
    bias = jax.random.uniform(kb, (n_classes,), jnp.float32, -k, k)
    return weight, bias


# ----------------------------------------------------------------------------- forward

def classifier_forward(features, w_hc, b2d, tile_n=None, out_dtype=jnp.float32):
    """features: [N, H]; w_hc: [H, C]; b2d: [1, C] (from prepare_classifier_params).
    Returns [N, C] in `out_dtype` (f32 by default, matching nn.Linear on f32 input).
    """
    n, h = features.shape
    c = w_hc.shape[1]

    # Match the features to the stored weight dtype (bf16 by default).  Under a
    # jit with the upstream encoder this cast fuses into the producer.
    compute_dtype = w_hc.dtype
    x = features if features.dtype == compute_dtype else features.astype(compute_dtype)

    x_itemsize = jnp.dtype(compute_dtype).itemsize
    out_itemsize = jnp.dtype(out_dtype).itemsize
    resident_bytes = 2 * (h * c * jnp.dtype(w_hc.dtype).itemsize + c * 4)

    auto_tn, vmem_limit = _choose_tiling(n, h, c, x_itemsize, out_itemsize,
                                         resident_bytes)
    tn = tile_n if tile_n is not None else auto_tn
    grid = (pl.cdiv(n, tn),)

    cost = pl.CostEstimate(
        flops=2 * n * h * c,
        transcendentals=0,
        bytes_accessed=(n * h * x_itemsize
                        + h * c * jnp.dtype(w_hc.dtype).itemsize
                        + c * 4
                        + n * c * out_itemsize),
    )

    return pl.pallas_call(
        _linear_kernel,
        out_shape=jax.ShapeDtypeStruct((n, c), out_dtype),
        grid_spec=pltpu.PrefetchScalarGridSpec(
            num_scalar_prefetch=0,
            grid=grid,
            in_specs=[
                # streaming row tiles of the features (double-buffered)
                pl.BlockSpec((tn, h), lambda i: (i, 0)),
                # weight / bias stay resident in VMEM across all grid steps
                pl.BlockSpec((h, c), lambda i: (0, 0)),
                pl.BlockSpec((1, c), lambda i: (0, 0)),
            ],
            # exact [N, C] output — no padded writeback, no post-kernel slice pass
            out_specs=pl.BlockSpec((tn, c), lambda i: (i, 0)),
        ),
        compiler_params=pltpu.CompilerParams(
            dimension_semantics=("parallel",),
            vmem_limit_bytes=vmem_limit,
        ),
        cost_estimate=cost,
    )(x, w_hc, b2d)


# ----------------------------------------------------------------------------- demo

if __name__ == "__main__":
    n_hidden, n_classes = 32, 16

    key = jax.random.PRNGKey(0)
    k_feat, k_param = jax.random.split(key)
    weight, bias = init_classifier_params(k_param, n_hidden, n_classes)

    # --- bf16 compute path (default): one-time transpose + bf16 weight ---------
    w_hc, b2d = prepare_classifier_params(weight, bias)               # bf16 weight
    w_q = w_hc.astype(jnp.float32)                                    # quantized ref weight

    def ref_bf16(f):   # reference with the same bf16 input quantization, f32 accumulation
        return f.astype(jnp.bfloat16).astype(jnp.float32) @ w_q + bias

    def ref_f32(f):
        return f @ weight.T + bias

    # case 1: small batch, single full-extent block
    f_small = jax.random.normal(k_feat, (8, n_hidden), jnp.float32)
    out_small = classifier_forward(f_small, w_hc, b2d)
    jax.block_until_ready(out_small)
    assert out_small.shape == (8, n_classes)
    assert jnp.allclose(out_small, ref_bf16(f_small), atol=2e-3, rtol=2e-3)
    assert jnp.allclose(out_small, ref_f32(f_small), atol=5e-2, rtol=5e-2)

    # case 2: tiled batch — multiple pipelined grid steps (even division)
    f_med = jax.random.normal(jax.random.PRNGKey(1), (64, n_hidden), jnp.float32)
    out_med = classifier_forward(f_med, w_hc, b2d, tile_n=16)
    jax.block_until_ready(out_med)
    assert out_med.shape == (64, n_classes)
    assert jnp.allclose(out_med, ref_bf16(f_med), atol=2e-3, rtol=2e-3)

    # case 3: ragged last tile (pl.cdiv grid, masked writeback of the tail)
    f_rag = jax.random.normal(jax.random.PRNGKey(2), (20, n_hidden), jnp.float32)
    out_rag = classifier_forward(f_rag, w_hc, b2d, tile_n=16)
    jax.block_until_ready(out_rag)
    assert out_rag.shape == (20, n_classes)
    assert jnp.allclose(out_rag, ref_bf16(f_rag), atol=2e-3, rtol=2e-3)

    # case 4: exact f32 path (bit-accuracy check of the kernel structure itself)
    w_hc32, b2d32 = prepare_classifier_params(weight, bias, param_dtype=jnp.float32)
    out_f32 = classifier_forward(f_med, w_hc32, b2d32, tile_n=16)
    jax.block_until_ready(out_f32)
    assert jnp.allclose(out_f32, ref_f32(f_med), atol=1e-5, rtol=1e-5)

    print("KERNEL_OK")
</pallas_src>

<mosaic_0001>
module attributes {stable_mosaic.version = 11 : i64} {
  func.func @_linear_kernel(%arg0: i32, %arg1: memref<8x32xbf16, #tpu.memory_space<vmem>>, %arg2: memref<32x16xbf16, #tpu.memory_space<vmem>>, %arg3: memref<1x16xf32, #tpu.memory_space<vmem>>, %arg4: memref<8x16xf32, #tpu.memory_space<vmem>>) attributes {dimension_semantics = [#tpu.dimension_semantics<parallel>], iteration_bounds = array<i64: 1>, scalar_prefetch = 0 : i64, scratch_operands = 0 : i64, tpu.core_type = #tpu.core_type<tc>, window_params = [{transform_indices = @transform_0, window_bounds = array<i64: 8, 32>}, {pipeline_mode = #tpu.pipeline_mode<synchronous>, transform_indices = @transform_1, window_bounds = array<i64: 32, 16>}, {pipeline_mode = #tpu.pipeline_mode<synchronous>, transform_indices = @transform_2, window_bounds = array<i64: 1, 16>}, {transform_indices = @transform_3, window_bounds = array<i64: 8, 16>}]} {
    %c0 = arith.constant 0 : index
    %c0_0 = arith.constant 0 : index
    %0 = vector.load %arg1[%c0, %c0_0] : memref<8x32xbf16, #tpu.memory_space<vmem>>, vector<8x32xbf16>
    %c0_1 = arith.constant 0 : index
    %c0_2 = arith.constant 0 : index
    %1 = vector.load %arg2[%c0_1, %c0_2] : memref<32x16xbf16, #tpu.memory_space<vmem>>, vector<32x16xbf16>
    %cst = arith.constant dense<0.000000e+00> : vector<8x16xf32>
    %2 = tpu.matmul %0, %1, %cst {dimension_numbers = #tpu.dot_dimension_numbers<[1], [0], [0], [1], [0, 0, 1, 1], [], []>} : vector<8x32xbf16>, vector<32x16xbf16>, vector<8x16xf32> -> vector<8x16xf32>
    %c0_3 = arith.constant 0 : index
    %c0_4 = arith.constant 0 : index
    %3 = vector.load %arg3[%c0_3, %c0_4] : memref<1x16xf32, #tpu.memory_space<vmem>>, vector<1x16xf32>
    %4 = vector.broadcast %3 : vector<1x16xf32> to vector<8x16xf32>
    %5 = arith.addf %2, %4 : vector<8x16xf32>
    %c0_5 = arith.constant 0 : index
    %c0_6 = arith.constant 0 : index
    %6 = vector.load %arg4[%c0_5, %c0_6] : memref<8x16xf32, #tpu.memory_space<vmem>>, vector<8x16xf32>
    tpu.vector_store %arg4[%c0_5, %c0_6], %5 {strides = array<i32>} : memref<8x16xf32, #tpu.memory_space<vmem>>, vector<8x16xf32>,
    return
  }
  func.func @transform_0(%arg0: i32) -> (i32, i32) {
    %c0_i32 = arith.constant 0 : i32
    %c0_i32_0 = arith.constant 0 : i32
    return %arg0, %c0_i32 : i32, i32
  }
  func.func @transform_1(%arg0: i32) -> (i32, i32) {
    %c0_i32 = arith.constant 0 : i32
    %c0_i32_0 = arith.constant 0 : i32
    %c0_i32_1 = arith.constant 0 : i32
    return %c0_i32, %c0_i32_0 : i32, i32
  }
  func.func @transform_2(%arg0: i32) -> (i32, i32) {
    %c0_i32 = arith.constant 0 : i32
    %c0_i32_0 = arith.constant 0 : i32
    %c0_i32_1 = arith.constant 0 : i32
    return %c0_i32, %c0_i32_0 : i32, i32
  }
  func.func @transform_3(%arg0: i32) -> (i32, i32) {
    %c0_i32 = arith.constant 0 : i32
    %c0_i32_0 = arith.constant 0 : i32
    return %arg0, %c0_i32 : i32, i32
  }
}

</mosaic_0001>

<llo_original>
// kernel: tpu_custom_call.1
$region0: #{tpu_custom_call.1}
  #allocation0 [shape = 'u32[]', space=smem, size = 0x4, offset = 0x4, fixed_abs, tag = 'smem constant byte address 0x4 - core index']
  #allocation1 [shape = 'u32[72,128]{1,0:T(1,128)}', space=vmem, size = 0x9000, scoped, tag = 'internal scratch']
  %s0 = inlined_call_operand.vmem [shape: bf16[8,32], index: 0, kind: input, shape index: {}]
  %s1 = inlined_call_operand.vmem [shape: bf16[32,16], index: 1, kind: input, shape index: {}]
  %s2 = inlined_call_operand.vmem [shape: f32[1,16], index: 2, kind: input, shape index: {}]
  %s3 = inlined_call_operand.hbm [shape: f32[8,16], index: 3, kind: output, shape index: {}]
  %s4 = sld [smem:[#allocation0]]
  $region22: #{tpu_custom_call.1} parent=0
    _
  %s6 = ssub.s32 1, %s4
  %s7 = scalar_select 0, %s6, %s4
  $region1: #{tpu_custom_call.1} parent=0
    #allocation2 [shape = 'u8[4096]{0}', space=vmem, size = 0x1000, scoped, tag = 'output window, operand 0, single buffered']
    #allocation3 [shape = 's32[1]{0}', space=sflag, size = 0x4, scoped, tag = 'scoped memory for tpu_custom_call.1']
    %8 = vsyncpa [#allocation3], 0
    // Predicated region
    $region2: #{tpu_custom_call.1} parent=1 // pred_check
      _
    $region3: #{tpu_custom_call.1} parent=1 // pred_check_branch
      %10 = sbr.rel (0) target = $region5
    $region4: #{tpu_custom_call.1} parent=1 // pred_region
      _
    $region5: #{tpu_custom_call.1} parent=1 // pred_fallthru
      _
    // Predicated region
    $region6: #{tpu_custom_call.1} parent=1 // pred_check
      _
    $region7: #{tpu_custom_call.1} parent=1 // pred_check_branch
      %12 = sbr.rel (0) target = $region9
    $region8: #{tpu_custom_call.1} parent=1 // pred_region
      _
    $region9: #{tpu_custom_call.1} parent=1 // pred_fallthru
      _
    // Predicated region
    $region10: #{tpu_custom_call.1} parent=1 // pred_check
      _
    $region11: #{tpu_custom_call.1} parent=1 // pred_check_branch
      %14 = sbr.rel (0) target = $region13
    $region12: #{tpu_custom_call.1} parent=1 // pred_region
      _
    $region13: #{tpu_custom_call.1} parent=1 // pred_fallthru
      _
    %v16 = vld [vmem:[%s0] sm:$0xf]
    %v17 = vld [vmem:[%s1] sm:$0xf]
    %v18 = vld [vmem:[%s1 + $0x4] sm:$0xf]
    %v19 = vld [vmem:[%s1 + $0x8] sm:$0xf]
    %v20 = vld [vmem:[%s1 + $0xc] sm:$0xf]
    %v21 = vld [vmem:[%s2] sm:$0x1]
    %v23 = vperm.slane %v21, 0
    %v29 = vunpack.c.l.b16 %v17
    %v30 = vunpack.c.l.b16 %v18
    %v31 = vunpack.c.l.b16 %v19
    %v32 = vunpack.c.l.b16 %v20
    %v33 = vpack.c.b16 %v30, %v29
    %v34 = vpack.c.b16 %v32, %v31
    %vm37 = vcmask 261120
    %v39 = vsel %vm37, %v16, 0
    %41 = vmatpush.bf16.msra.mxu0 0
    %42 = vmatpush.bf16.msra.mxu0 0
    %43 = vmatpush.bf16.msra.mxu0 0
    %44 = vmatpush.bf16.msra.mxu0 0
    %45 = vmatpush.bf16.msra.mxu0 0
    %46 = vmatpush.bf16.msra.mxu0 0
    %47 = vmatpush.bf16.msra.mxu0 %v34
    %48 = vmatpush.bf16.msra.mxu0 %v33
    %49 = vmatmul.bf16.gmra.mxu0 %v39
    %v50 = vpop.f32.mrf.mxu0
    %v51 = vadd.f32 %v23, %v50
    %v52 = vpop.f32.mrf.mxu0
    %53 = vdwg.mxu0
    %vm54 = vcmask 130048
    %55 = vst.msk [vmem:[#allocation2] sm:$0xff] %vm54, %v51
    // Predicated region
    $region14: #{tpu_custom_call.1} parent=1 // pred_check
      _
    $region15: #{tpu_custom_call.1} parent=1 // pred_check_branch
      %57 = sbr.rel (0) target = $region17
    $region16: #{tpu_custom_call.1} parent=1 // pred_region
      %59 = vsyncadd [#allocation3], 0
      %s61 = sshll.u32 [#allocation2], 4
      %s62 = int_to_ptr.vmem [resolvable:$true] %s61
      %s63 = sshll.u32 %s3, 4
      %s64 = int_to_ptr.hbm [resolvable:$true] %s63
      %66 = dma.vmem_to_hbm [thread:$0]  %s62, 128, %s64, [#allocation3]
    $region17: #{tpu_custom_call.1} parent=1 // pred_fallthru
      _
    // Predicated region
    $region18: #{tpu_custom_call.1} parent=1 // pred_check
      _
    $region19: #{tpu_custom_call.1} parent=1 // pred_check_branch
      %68 = sbr.rel (0) target = $region21
    $region20: #{tpu_custom_call.1} parent=1 // pred_region
      %70 = dma.done [#allocation3], 128
    $region21: #{tpu_custom_call.1} parent=1 // pred_fallthru
      _
    %71 = vsyncpa [#allocation3], 1

</llo_original>
